<compile_context>
chip_gen: v5e
topology: v5e:2x2
jax: 0.10.0
libtpu: 0.0.40
codegen_flags: <defaults>
</compile_context>

<pallas_src>
import jax
import jax.numpy as jnp
from jax.experimental import pallas as pl
from jax.experimental.pallas import tpu as pltpu

_NEG = jnp.float32(-1e30)   # mask sentinel (finite: avoids inf-inf NaNs; exp underflows to 0)


def _gat_kernel(h_ref, ssrc_ref, sdst_ref, bias_ref, lbias_ref, out_ref, alpha_ref):
    # h_ref:     (B, N, Cp)  bf16  projected node features, zero-padded to Cp lanes
    # ssrc_ref:  (B, 1, N)   f32   per-source attention term <h_i, att_src>
    # sdst_ref:  (B, TJ, 1)  f32   per-target attention term <h_j, att_dst> (tile)
    # bias_ref:  (1, Cp)     f32   output bias, zero padded
    # lbias_ref: (TJ, N)     f32   pre-masked edge bias, target-major (-1e30 off-edge)
    # out_ref:   (B, TJ, Cp) bf16
    # alpha_ref: (B, TJ, N)  bf16  attention, target-major, 0 on non-edges
    logits = sdst_ref[...] + ssrc_ref[...] + lbias_ref[...][None]     # (B, TJ, N) f32
    leaky = jnp.maximum(logits, 0.2 * logits)                         # LeakyReLU(0.2)

    # Per-target softmax over sources (lane-axis reduce); non-edges carry -1e30 so
    # exp underflows to exactly 0; the self loop keeps the denominator finite.
    m = jnp.max(leaky, axis=2, keepdims=True)                         # (B, TJ, 1)
    p = jnp.exp(leaky - m)                                            # (B, TJ, N)
    denom = jnp.sum(p, axis=2, keepdims=True)                         # (B, TJ, 1)
    alpha = p * pl.reciprocal(denom, approx=True)                     # (B, TJ, N) f32

    alpha_bf = alpha.astype(jnp.bfloat16)
    alpha_ref[...] = alpha_bf                                         # bf16 writeback

    # out[b, j, :] = sum_i alpha[b, j, i] * h[b, i, :]   (transpose-free, bf16 MXU)
    out = jnp.einsum("bjn,bnc->bjc", alpha_bf, h_ref[...],
                     preferred_element_type=jnp.float32)              # (B, TJ, Cp) f32
    out_ref[...] = (out + bias_ref[...][None]).astype(out_ref.dtype)
    # TODO(synk): for very sparse graphs at large N, add a per-128-lane source-block
    # edge mask and skip exp/max/sum on fully masked blocks (kernel is EUP-bound).


def init_params(key, in_features, out_features):
    ks = jax.random.split(key, 6)
    s = 0.3
    return {
        "w_t":      s * jax.random.normal(ks[0], (in_features, out_features), jnp.float32),
        "att_src":  s * jax.random.normal(ks[1], (1, out_features), jnp.float32),
        "att_dst":  s * jax.random.normal(ks[2], (1, out_features), jnp.float32),
        "w_edge":   s * jax.random.normal(ks[3], (out_features,), jnp.float32),
        "att_edge": s * jax.random.normal(ks[4], (out_features,), jnp.float32),
        "bias":     s * jax.random.normal(ks[5], (1, out_features), jnp.float32),
    }


def _edge_preprocess(adj):
    """remove_self_loops + add_self_loops(fill_value='mean'), in dense form."""
    N = adj.shape[0]
    eye = jnp.eye(N, dtype=bool)
    nz = (adj != 0) & (~eye)                                   # off-diagonal edges i -> j
    deg_in = jnp.sum(nz, axis=0).astype(jnp.float32)
    attr_sum = jnp.sum(jnp.where(nz, adj, 0.0), axis=0)
    mean_in = jnp.where(deg_in > 0, attr_sum / jnp.maximum(deg_in, 1.0), 0.0)
    eattr = jnp.where(nz, adj, 0.0) + jnp.diag(mean_in)        # self-loop attr = mean incoming
    mask = nz | eye
    return eattr, mask


def _vmem_budget():
    """Generation-aware (tile budget, vmem_limit ceiling) in bytes."""
    cap = 64 * 2**20                       # if the query fails, assume the smallest (v7x)
    try:
        cap = int(pltpu.get_tpu_info().vmem_capacity_bytes)
    except Exception:
        pass
    if cap <= 64 * 2**20:                  # v7x: 64 MiB per TensorCore
        return 40 * 2**20, 48 * 2**20
    return 96 * 2**20, 112 * 2**20         # v5e / v6e: 128 MiB physical


def _pick_tile(B, N, Cp, budget_bytes):
    """Largest target-axis tile TJ (multiple of 8, dividing N, giving >= 2 grid
    steps) whose VMEM estimate fits the budget. Falls back to TJ = N."""
    def est(tj):
        const_in = 2 * (B * N * Cp * 2 + B * N * 4 + Cp * 4)       # h (bf16), s_src, bias
        tiled_in = 2 * (B * tj * 4 + tj * N * 4)                   # s_dst + lbias tiles (dbl-buf)
        outs     = 2 * (B * tj * Cp * 2 + B * tj * N * 2)          # bf16 out + alpha tiles
        tmps     = 4 * B * tj * N * 4                              # f32 logits/leaky/p temps
        return const_in + tiled_in + outs + tmps
    cands = [t for t in (4096, 2048, 1024, 512, 256, 128, 64, 32, 16, 8)
             if t <= N // 2 and N % t == 0]                        # >= 2 grid steps preferred
    for tj in cands:
        if est(tj) <= budget_bytes:
            return tj, est(tj)
    if cands:
        return cands[-1], est(cands[-1])
    # TODO(synk): pad N up to a multiple of 8 so ragged/prime N can still be tiled.
    return N, est(N)


def gat_forward(x, adj, params):
    B, N, Fin = x.shape
    C = params["w_t"].shape[1]
    Cp = ((C + 127) // 128) * 128                                   # lane-dense padded width
    hi = jax.lax.Precision.HIGHEST

    # ---- cheap wrapper-side prep, done once (not per target tile) ----
    eattr, mask = _edge_preprocess(adj)
    # edge_dim == 1  =>  alpha_edge(e) = e * <lin_edge.weight, att_edge>
    c_edge = jnp.sum(params["w_edge"] * params["att_edge"]).astype(jnp.float32)
    # target-major, pre-masked additive edge bias: lbias_t[j, i] for edge i -> j
    lbias_t = jnp.where(mask, c_edge * eattr, _NEG).T.astype(jnp.float32)

    # Projection + attention projections done ONCE here (XLA -> MXU); the Pallas
    # kernel only streams the O(N^2) softmax / aggregation work.
    w_t = params["w_t"].astype(jnp.float32)
    h = jnp.einsum("bnf,fc->bnc", x.astype(jnp.float32), w_t, precision=hi)    # (B, N, C)
    s_src = jnp.einsum("bnc,c->bn", h, params["att_src"][0], precision=hi)     # (B, N)
    s_dst = jnp.einsum("bnc,c->bn", h, params["att_dst"][0], precision=hi)     # (B, N)

    h_p = jnp.pad(h, ((0, 0), (0, 0), (0, Cp - C))).astype(jnp.bfloat16)       # (B, N, Cp)
    ssrc = s_src.reshape(B, 1, N).astype(jnp.float32)                          # (B, 1, N)
    sdst = s_dst.reshape(B, N, 1).astype(jnp.float32)                          # (B, N, 1)
    bias_p = jnp.pad(params["bias"].astype(jnp.float32), ((0, 0), (0, Cp - C)))

    budget, limit_ceiling = _vmem_budget()
    TJ, vmem_need = _pick_tile(B, N, Cp, budget)
    vmem_limit = int(min(limit_ceiling, max(32 * 2**20, 2 * vmem_need)))

    out_p, alpha_t = pl.pallas_call(
        _gat_kernel,
        out_shape=(jax.ShapeDtypeStruct((B, N, Cp), jnp.bfloat16),
                   jax.ShapeDtypeStruct((B, N, N), jnp.bfloat16)),
        grid=(N // TJ,),
        in_specs=[
            pl.BlockSpec((B, N, Cp), lambda t: (0, 0, 0)),   # h        (grid-invariant)
            pl.BlockSpec((B, 1, N),  lambda t: (0, 0, 0)),   # s_src    (grid-invariant)
            pl.BlockSpec((B, TJ, 1), lambda t: (0, t, 0)),   # s_dst    (target tile)
            pl.BlockSpec((1, Cp),    lambda t: (0, 0)),      # bias     (grid-invariant)
            pl.BlockSpec((TJ, N),    lambda t: (t, 0)),      # edge bias (target tile)
        ],
        out_specs=(pl.BlockSpec((B, TJ, Cp), lambda t: (0, t, 0)),
                   pl.BlockSpec((B, TJ, N),  lambda t: (0, t, 0))),
        compiler_params=pltpu.CompilerParams(
            dimension_semantics=("parallel",),
            vmem_limit_bytes=vmem_limit),
    )(h_p, ssrc, sdst, bias_p, lbias_t)

    out = out_p[:, :, :C].astype(jnp.float32)     # drop lane padding
    # alpha is returned TARGET-MAJOR and bf16: alpha[b, j, i] is the attention of
    # source node i for target node j (zeros on non-edges).
    return out, alpha_t


def gat_reference(x, adj, p):
    """Pure-JAX f32 reference of the same GATConv math (for correctness check)."""
    hi = jax.lax.Precision.HIGHEST
    eattr, mask = _edge_preprocess(adj)
    c_edge = jnp.sum(p["w_edge"] * p["att_edge"])
    h = jnp.einsum("bnf,fc->bnc", x, p["w_t"], precision=hi)
    s_src = jnp.einsum("bnc,c->bn", h, p["att_src"][0], precision=hi)
    s_dst = jnp.einsum("bnc,c->bn", h, p["att_dst"][0], precision=hi)
    logits = s_src[:, :, None] + s_dst[:, None, :] + c_edge * eattr[None]
    leaky = jnp.where(logits > 0, logits, 0.2 * logits)
    masked = jnp.where(mask[None], leaky, -jnp.inf)
    alpha = jax.nn.softmax(masked, axis=1)
    alpha = jnp.where(mask[None], alpha, 0.0)
    out = jnp.einsum("bij,bic->bjc", alpha, h, precision=hi) + p["bias"]
    return out, alpha                      # alpha is source-major: alpha[b, i, j]


if __name__ == "__main__":
    key = jax.random.PRNGKey(0)
    kx, kadj, kp = jax.random.split(key, 3)

    B, N, Fin, C = 2, 16, 8, 32            # batch, num nodes, in_features, out_features
    x = jax.random.normal(kx, (B, N, Fin), jnp.float32)
    keep = jax.random.bernoulli(kadj, 0.35, (N, N))
    weights = jax.random.uniform(jax.random.fold_in(kadj, 1), (N, N), jnp.float32, 0.5, 1.5)
    adj = jnp.where(keep, weights, 0.0)

    params = init_params(kp, Fin, C)

    out, alpha_t = jax.jit(gat_forward)(x, adj, params)
    out = jax.block_until_ready(out)
    alpha_t = jax.block_until_ready(alpha_t)

    ref_out, ref_alpha = gat_reference(x, adj, params)
    ref_alpha_t = jnp.swapaxes(ref_alpha, 1, 2)          # reference in target-major layout
    assert out.shape == (B, N, C) and alpha_t.shape == (B, N, N)
    # Tolerances account for bf16 MXU operands / bf16 stores + approximate reciprocal.
    assert jnp.allclose(out, ref_out, rtol=5e-2, atol=5e-2), "output mismatch"
    assert jnp.allclose(alpha_t.astype(jnp.float32), ref_alpha_t,
                        rtol=5e-2, atol=2e-2), "alpha mismatch"
    print("KERNEL_OK")
</pallas_src>

<mosaic_0001>
module attributes {stable_mosaic.version = 11 : i64} {
  func.func @_gat_kernel(%arg0: i32, %arg1: memref<2x16x128xbf16, #tpu.memory_space<vmem>>, %arg2: memref<2x1x16xf32, #tpu.memory_space<vmem>>, %arg3: memref<2x8x1xf32, #tpu.memory_space<vmem>>, %arg4: memref<1x128xf32, #tpu.memory_space<vmem>>, %arg5: memref<8x16xf32, #tpu.memory_space<vmem>>, %arg6: memref<2x8x128xbf16, #tpu.memory_space<vmem>>, %arg7: memref<2x8x16xbf16, #tpu.memory_space<vmem>>) attributes {dimension_semantics = [#tpu.dimension_semantics<parallel>], iteration_bounds = array<i64: 2>, scalar_prefetch = 0 : i64, scratch_operands = 0 : i64, tpu.core_type = #tpu.core_type<tc>, window_params = [{pipeline_mode = #tpu.pipeline_mode<synchronous>, transform_indices = @transform_0, window_bounds = array<i64: 2, 16, 128>}, {pipeline_mode = #tpu.pipeline_mode<synchronous>, transform_indices = @transform_1, window_bounds = array<i64: 2, 1, 16>}, {transform_indices = @transform_2, window_bounds = array<i64: 2, 8, 1>}, {pipeline_mode = #tpu.pipeline_mode<synchronous>, transform_indices = @transform_3, window_bounds = array<i64: 1, 128>}, {transform_indices = @transform_4, window_bounds = array<i64: 8, 16>}, {transform_indices = @transform_5, window_bounds = array<i64: 2, 8, 128>}, {transform_indices = @transform_6, window_bounds = array<i64: 2, 8, 16>}]} {
    %c0 = arith.constant 0 : index
    %c0_0 = arith.constant 0 : index
    %c0_1 = arith.constant 0 : index
    %0 = vector.load %arg3[%c0, %c0_0, %c0_1] : memref<2x8x1xf32, #tpu.memory_space<vmem>>, vector<2x8x1xf32>
    %c0_2 = arith.constant 0 : index
    %c0_3 = arith.constant 0 : index
    %c0_4 = arith.constant 0 : index
    %1 = vector.load %arg2[%c0_2, %c0_3, %c0_4] : memref<2x1x16xf32, #tpu.memory_space<vmem>>, vector<2x1x16xf32>
    %2 = vector.broadcast %0 : vector<2x8x1xf32> to vector<2x8x16xf32>
    %3 = vector.broadcast %1 : vector<2x1x16xf32> to vector<2x8x16xf32>
    %4 = arith.addf %2, %3 : vector<2x8x16xf32>
    %c0_5 = arith.constant 0 : index
    %c0_6 = arith.constant 0 : index
    %5 = vector.load %arg5[%c0_5, %c0_6] : memref<8x16xf32, #tpu.memory_space<vmem>>, vector<8x16xf32>
    %6 = vector.shape_cast %5 : vector<8x16xf32> to vector<1x8x16xf32>
    %7 = vector.broadcast %6 : vector<1x8x16xf32> to vector<2x8x16xf32>
    %8 = arith.addf %4, %7 : vector<2x8x16xf32>
    %cst = arith.constant 2.000000e-01 : f32
    %9 = vector.broadcast %cst : f32 to vector<2x8x16xf32>
    %10 = arith.mulf %9, %8 : vector<2x8x16xf32>
    %11 = arith.maximumf %8, %10 : vector<2x8x16xf32>
    %cst_7 = arith.constant dense<0xFF800000> : vector<2x8xf32>
    %12 = vector.multi_reduction <maximumf>, %11, %cst_7 [2] : vector<2x8x16xf32> to vector<2x8xf32>
    %13 = vector.shape_cast %12 : vector<2x8xf32> to vector<2x8x1xf32>
    %14 = vector.broadcast %13 : vector<2x8x1xf32> to vector<2x8x16xf32>
    %15 = arith.subf %11, %14 : vector<2x8x16xf32>
    %16 = math.exp %15 : vector<2x8x16xf32>
    %cst_8 = arith.constant dense<0.000000e+00> : vector<2x8xf32>
    %17 = vector.multi_reduction <add>, %16, %cst_8 [2] : vector<2x8x16xf32> to vector<2x8xf32>
    %18 = vector.shape_cast %17 : vector<2x8xf32> to vector<2x8x1xf32>
    %19 = tpu.reciprocal %18 {approx = true} : vector<2x8x1xf32> -> vector<2x8x1xf32>
    %20 = vector.broadcast %19 : vector<2x8x1xf32> to vector<2x8x16xf32>
    %21 = arith.mulf %16, %20 : vector<2x8x16xf32>
    %22 = arith.truncf %21 : vector<2x8x16xf32> to vector<2x8x16xbf16>
    %c0_9 = arith.constant 0 : index
    %c0_10 = arith.constant 0 : index
    %c0_11 = arith.constant 0 : index
    %23 = vector.load %arg7[%c0_9, %c0_10, %c0_11] : memref<2x8x16xbf16, #tpu.memory_space<vmem>>, vector<2x8x16xbf16>
    tpu.vector_store %arg7[%c0_9, %c0_10, %c0_11], %22 {strides = array<i32>} : memref<2x8x16xbf16, #tpu.memory_space<vmem>>, vector<2x8x16xbf16>,
    %c0_12 = arith.constant 0 : index
    %c0_13 = arith.constant 0 : index
    %c0_14 = arith.constant 0 : index
    %24 = vector.load %arg1[%c0_12, %c0_13, %c0_14] : memref<2x16x128xbf16, #tpu.memory_space<vmem>>, vector<2x16x128xbf16>
    "tpu.trace_start"() <{level = 10 : i32, message = "bjn,bnc->bjc"}> : () -> ()
    %cst_15 = arith.constant dense<0.000000e+00> : vector<2x8x128xf32>
    %25 = tpu.matmul %22, %24, %cst_15 {dimension_numbers = #tpu.dot_dimension_numbers<[2], [1], [1], [2], [0, 0, 0, 1, 1, 2], [0], [0]>} : vector<2x8x16xbf16>, vector<2x16x128xbf16>, vector<2x8x128xf32> -> vector<2x8x128xf32>
    "tpu.trace_stop"() : () -> ()
    %c0_16 = arith.constant 0 : index
    %c0_17 = arith.constant 0 : index
    %26 = vector.load %arg4[%c0_16, %c0_17] : memref<1x128xf32, #tpu.memory_space<vmem>>, vector<1x128xf32>
    %27 = vector.shape_cast %26 : vector<1x128xf32> to vector<1x1x128xf32>
    %28 = vector.broadcast %27 : vector<1x1x128xf32> to vector<2x8x128xf32>
    %29 = arith.addf %25, %28 : vector<2x8x128xf32>
    %30 = arith.truncf %29 : vector<2x8x128xf32> to vector<2x8x128xbf16>
    %c0_18 = arith.constant 0 : index
    %c0_19 = arith.constant 0 : index
    %c0_20 = arith.constant 0 : index
    %31 = vector.load %arg6[%c0_18, %c0_19, %c0_20] : memref<2x8x128xbf16, #tpu.memory_space<vmem>>, vector<2x8x128xbf16>
    tpu.vector_store %arg6[%c0_18, %c0_19, %c0_20], %30 {strides = array<i32>} : memref<2x8x128xbf16, #tpu.memory_space<vmem>>, vector<2x8x128xbf16>,
    return
  }
  func.func @transform_0(%arg0: i32) -> (i32, i32, i32) {
    %c0_i32 = arith.constant 0 : i32
    %c0_i32_0 = arith.constant 0 : i32
    %c0_i32_1 = arith.constant 0 : i32
    %c0_i32_2 = arith.constant 0 : i32
    return %c0_i32, %c0_i32_0, %c0_i32_1 : i32, i32, i32
  }
  func.func @transform_1(%arg0: i32) -> (i32, i32, i32) {
    %c0_i32 = arith.constant 0 : i32
    %c0_i32_0 = arith.constant 0 : i32
    %c0_i32_1 = arith.constant 0 : i32
    %c0_i32_2 = arith.constant 0 : i32
    return %c0_i32, %c0_i32_0, %c0_i32_1 : i32, i32, i32
  }
  func.func @transform_2(%arg0: i32) -> (i32, i32, i32) {
    %c0_i32 = arith.constant 0 : i32
    %c0_i32_0 = arith.constant 0 : i32
    %c0_i32_1 = arith.constant 0 : i32
    return %c0_i32, %arg0, %c0_i32_0 : i32, i32, i32
  }
  func.func @transform_3(%arg0: i32) -> (i32, i32) {
    %c0_i32 = arith.constant 0 : i32
    %c0_i32_0 = arith.constant 0 : i32
    %c0_i32_1 = arith.constant 0 : i32
    return %c0_i32, %c0_i32_0 : i32, i32
  }
  func.func @transform_4(%arg0: i32) -> (i32, i32) {
    %c0_i32 = arith.constant 0 : i32
    %c0_i32_0 = arith.constant 0 : i32
    return %arg0, %c0_i32 : i32, i32
  }
  func.func @transform_5(%arg0: i32) -> (i32, i32, i32) {
    %c0_i32 = arith.constant 0 : i32
    %c0_i32_0 = arith.constant 0 : i32
    %c0_i32_1 = arith.constant 0 : i32
    return %c0_i32, %arg0, %c0_i32_0 : i32, i32, i32
  }
  func.func @transform_6(%arg0: i32) -> (i32, i32, i32) {
    %c0_i32 = arith.constant 0 : i32
    %c0_i32_0 = arith.constant 0 : i32
    %c0_i32_1 = arith.constant 0 : i32
    return %c0_i32, %arg0, %c0_i32_0 : i32, i32, i32
  }
}

</mosaic_0001>

<llo_original>
// kernel: gat_forward.1
$region0: #{gat_forward.1}
  #allocation0 [shape = 'u32[]', space=smem, size = 0x4, offset = 0x4, fixed_abs, tag = 'smem constant byte address 0x4 - core index']
  #allocation1 [shape = 'u32[72,128]{1,0:T(1,128)}', space=vmem, size = 0x9000, scoped, tag = 'internal scratch']
  %s0 = inlined_call_operand.vmem [shape: bf16[2,16,128], index: 0, kind: input, shape index: {}]
  %s1 = inlined_call_operand.vmem [shape: f32[2,1,16], index: 1, kind: input, shape index: {}]
  %s2 = inlined_call_operand.vmem [shape: f32[2,16,1], index: 2, kind: input, shape index: {}]
  %s3 = inlined_call_operand.vmem [shape: f32[1,128], index: 3, kind: input, shape index: {}]
  %s4 = inlined_call_operand.vmem [shape: f32[16,16], index: 4, kind: input, shape index: {}]
  %s5 = inlined_call_operand.vmem [shape: bf16[2,16,128], index: 5, kind: output, shape index: {0}]
  %s6 = inlined_call_operand.hbm [shape: bf16[2,16,16], index: 6, kind: output, shape index: {1}]
  %7 = xla_tuple %s5, %s6
  %s8 = sld [smem:[#allocation0]]
  $region136: #{gat_forward.1} parent=0
    _
  %s10 = ssub.s32 1, %s8
  %s11 = scalar_select 0, %s10, %s8
  $region1: #{gat_forward.1} parent=0
    #allocation2 [shape = 'u8[16384]{0}', space=vmem, size = 0x4000, scoped, tag = 'input window, operand 2']
    #allocation3 [shape = 'u8[8192]{0}', space=vmem, size = 0x2000, scoped, tag = 'output window, operand 0']
    #allocation4 [shape = 'u8[8192]{0}', space=vmem, size = 0x2000, scoped, tag = 'output window, operand 1']
    #allocation5 [shape = 's32[2]{0}', space=sflag, size = 0x8, scoped, tag = 'scoped memory for gat_forward.1']
    %12 = vsyncpa [#allocation5], 0
    %s13 = scalar_lea.sflag [#allocation5], 1
    %14 = vsyncpa %s13, 0
    loop: start=0, step=1, limit=4
    $region2: #{gat_forward.1} parent=1 // loop_pre_header
      _
    $region3: #{gat_forward.1} parent=1 // loop_header
      %s16 = sphi 0, %s20
      %p17 = scmp.ge.s32.totalorder %s16, 4
      %s24 = sphi 0, %s24
      %s26 = sphi 0, %s24
      %s27 = sphi 0, %s26
      %s41 = sphi 0, %s27
      %s45 = sphi 0, %s45
      %s47 = sphi 0, %s45
      %s48 = sphi 0, %s47
      %s62 = sphi 0, %s48
      %s68 = sphi 0, %s70
      %s71 = sphi 0, %s68
      %s72 = sphi 0, %s71
      %s88 = sphi 0, %s72
      %s92 = sphi 0, %s92
      %s94 = sphi 0, %s92
      %s95 = sphi 0, %s94
      %s109 = sphi 0, %s95
      %s115 = sphi 0, %s117
      %s118 = sphi 0, %s115
      %s119 = sphi 0, %s118
      %s135 = sphi 0, %s119
      %s141 = sphi 0, %s143
      %s144 = sphi 0, %s141
      %s145 = sphi 0, %s144
      %s161 = sphi 0, %s145
      %s167 = sphi 0, %s169
      %s170 = sphi 0, %s167
      %s171 = sphi 0, %s170
      %s187 = sphi 0, %s171
    $region4: #{gat_forward.1} parent=1 // loop_header_branch
      %19 = sbr.rel (%p17) target = $region8
    $region5: #{gat_forward.1} parent=1 // loop_body
      %s21 = ssub.s32 %s16, 1
      %s22 = ssub.s32 %s16, 2
      %s23 = sadd.s32 %s16, 1
      %s25 = sadd.s32 %s24, 1
      %p28 = scmp.eq.s32.totalorder %s16, 1
      %p29 = scmp.ne.s32.totalorder %s24, %s26
      %p30 = scmp.eq.s32.totalorder %s16, 0
      %p31 = por %p29, %p30
      %p32 = scmp.ne.s32.totalorder %s24, %s26
      %p33 = scmp.eq.s32.totalorder %s21, 1
      %p34 = por %p32, %p33
      %p35 = scmp.ne.s32.totalorder %s26, %s27
      %p36 = scmp.eq.s32.totalorder %s21, 0
      %p37 = por %p35, %p36
      %p38 = scmp.ne.s32.totalorder %s26, %s27
      %p39 = scmp.eq.s32.totalorder %s22, 1
      %p40 = por %p38, %p39
      %p42 = scmp.ne.s32.totalorder %s27, %s41
      %p43 = scmp.eq.s32.totalorder %s22, 0
      %p44 = por %p42, %p43
      %s46 = sadd.s32 %s45, 1
      %p49 = scmp.eq.s32.totalorder %s16, 1
      %p50 = scmp.ne.s32.totalorder %s45, %s47
      %p51 = scmp.eq.s32.totalorder %s16, 0
      %p52 = por %p50, %p51
      %p53 = scmp.ne.s32.totalorder %s45, %s47
      %p54 = scmp.eq.s32.totalorder %s21, 1
      %p55 = por %p53, %p54
      %p56 = scmp.ne.s32.totalorder %s47, %s48
      %p57 = scmp.eq.s32.totalorder %s21, 0
      %p58 = por %p56, %p57
      %p59 = scmp.ne.s32.totalorder %s47, %s48
      %p60 = scmp.eq.s32.totalorder %s22, 1
      %p61 = por %p59, %p60
      %p63 = scmp.ne.s32.totalorder %s48, %s62
      %p64 = scmp.eq.s32.totalorder %s22, 0
      %p65 = por %p63, %p64
      %s66 = ssub.s32 %s16, %s23
      %p67 = scmp.eq.s32.totalorder %s66, 0
      %s69 = sadd.s32 %s68, 1
      %s70 = scalar_select %p67, %s68, %s69
      %p73 = pneg %p67
      %p74 = scmp.eq.s32.totalorder %s16, 1
      %p75 = por %p73, %p74
      %p76 = scmp.ne.s32.totalorder %s68, %s71
      %p77 = scmp.eq.s32.totalorder %s16, 0
      %p78 = por %p76, %p77
      %p79 = scmp.ne.s32.totalorder %s68, %s71
      %p80 = scmp.eq.s32.totalorder %s21, 1
      %p81 = por %p79, %p80
      %p82 = scmp.ne.s32.totalorder %s71, %s72
      %p83 = scmp.eq.s32.totalorder %s21, 0
      %p84 = por %p82, %p83
      %p85 = scmp.ne.s32.totalorder %s71, %s72
      %p86 = scmp.eq.s32.totalorder %s22, 1
      %p87 = por %p85, %p86
      %p89 = scmp.ne.s32.totalorder %s72, %s88
      %p90 = scmp.eq.s32.totalorder %s22, 0
      %p91 = por %p89, %p90
      %s93 = sadd.s32 %s92, 1
      %p96 = scmp.eq.s32.totalorder %s16, 1
      %p97 = scmp.ne.s32.totalorder %s92, %s94
      %p98 = scmp.eq.s32.totalorder %s16, 0
      %p99 = por %p97, %p98
      %p100 = scmp.ne.s32.totalorder %s92, %s94
      %p101 = scmp.eq.s32.totalorder %s21, 1
      %p102 = por %p100, %p101
      %p103 = scmp.ne.s32.totalorder %s94, %s95
      %p104 = scmp.eq.s32.totalorder %s21, 0
      %p105 = por %p103, %p104
      %p106 = scmp.ne.s32.totalorder %s94, %s95
      %p107 = scmp.eq.s32.totalorder %s22, 1
      %p108 = por %p106, %p107
      %p110 = scmp.ne.s32.totalorder %s95, %s109
      %p111 = scmp.eq.s32.totalorder %s22, 0
      %p112 = por %p110, %p111
      %s113 = ssub.s32 %s16, %s23
      %p114 = scmp.eq.s32.totalorder %s113, 0
      %s116 = sadd.s32 %s115, 1
      %s117 = scalar_select %p114, %s115, %s116
      %p120 = pneg %p114
      %p121 = scmp.eq.s32.totalorder %s16, 1
      %p122 = por %p120, %p121
      %p123 = scmp.ne.s32.totalorder %s115, %s118
      %p124 = scmp.eq.s32.totalorder %s16, 0
      %p125 = por %p123, %p124
      %p126 = scmp.ne.s32.totalorder %s115, %s118
      %p127 = scmp.eq.s32.totalorder %s21, 1
      %p128 = por %p126, %p127
      %p129 = scmp.ne.s32.totalorder %s118, %s119
      %p130 = scmp.eq.s32.totalorder %s21, 0
      %p131 = por %p129, %p130
      %p132 = scmp.ne.s32.totalorder %s118, %s119
      %p133 = scmp.eq.s32.totalorder %s22, 1
      %p134 = por %p132, %p133
      %p136 = scmp.ne.s32.totalorder %s119, %s135
      %p137 = scmp.eq.s32.totalorder %s22, 0
      %p138 = por %p136, %p137
      %s139 = ssub.s32 %s16, %s23
      %p140 = scmp.eq.s32.totalorder %s139, 0
      %s142 = sadd.s32 %s141, 1
      %s143 = scalar_select %p140, %s141, %s142
      %p146 = pneg %p140
      %p147 = scmp.eq.s32.totalorder %s16, 1
      %p148 = por %p146, %p147
      %p149 = scmp.ne.s32.totalorder %s141, %s144
      %p150 = scmp.eq.s32.totalorder %s16, 0
      %p151 = por %p149, %p150
      %p152 = scmp.ne.s32.totalorder %s141, %s144
      %p153 = scmp.eq.s32.totalorder %s21, 1
      %p154 = por %p152, %p153
      %p155 = scmp.ne.s32.totalorder %s144, %s145
      %p156 = scmp.eq.s32.totalorder %s21, 0
      %p157 = por %p155, %p156
      %p158 = scmp.ne.s32.totalorder %s144, %s145
      %p159 = scmp.eq.s32.totalorder %s22, 1
      %p160 = por %p158, %p159
      %p162 = scmp.ne.s32.totalorder %s145, %s161
      %p163 = scmp.eq.s32.totalorder %s22, 0
      %p164 = por %p162, %p163
      %s165 = ssub.s32 %s16, %s23
      %p166 = scmp.eq.s32.totalorder %s165, 0
      %s168 = sadd.s32 %s167, 1
      %s169 = scalar_select %p166, %s167, %s168
      %p172 = pneg %p166
      %p173 = scmp.eq.s32.totalorder %s16, 1
      %p174 = por %p172, %p173
      %p175 = scmp.ne.s32.totalorder %s167, %s170
      %p176 = scmp.eq.s32.totalorder %s16, 0
      %p177 = por %p175, %p176
      %p178 = scmp.ne.s32.totalorder %s167, %s170
      %p179 = scmp.eq.s32.totalorder %s21, 1
      %p180 = por %p178, %p179
      %p181 = scmp.ne.s32.totalorder %s170, %s171
      %p182 = scmp.eq.s32.totalorder %s21, 0
      %p183 = por %p181, %p182
      %p184 = scmp.ne.s32.totalorder %s170, %s171
      %p185 = scmp.eq.s32.totalorder %s22, 1
      %p186 = por %p184, %p185
      %p188 = scmp.ne.s32.totalorder %s171, %s187
      %p189 = scmp.eq.s32.totalorder %s22, 0
      %p190 = por %p188, %p189
      %p191 = scmp.le.s32.totalorder 1, %s16
      %p192 = scmp.lt.s32.totalorder %s16, 3
      %p193 = pnand %p191, %p192
      %p194 = pneg %p193
      // Predicated region
      $region9: #{gat_forward.1} parent=5 // pred_check
        _
      $region10: #{gat_forward.1} parent=5 // pred_check_branch
        %196 = sbr.rel (%p193) target = $region12
      $region11: #{gat_forward.1} parent=5 // pred_region
        %s197 = ssub.s32 %s16, 1
        // Predicated region
        $region13: #{gat_forward.1} parent=11 // pred_check
          %p198 = pneg %p37
        $region14: #{gat_forward.1} parent=11 // pred_check_branch
          %200 = sbr.rel (%p198) target = $region16
        $region15: #{gat_forward.1} parent=11 // pred_region
          _
        $region16: #{gat_forward.1} parent=11 // pred_fallthru
          _
        // Predicated region
        $region17: #{gat_forward.1} parent=11 // pred_check
          %p201 = pneg %p58
        $region18: #{gat_forward.1} parent=11 // pred_check_branch
          %203 = sbr.rel (%p201) target = $region20
        $region19: #{gat_forward.1} parent=11 // pred_region
          _
        $region20: #{gat_forward.1} parent=11 // pred_fallthru
          _
        // Predicated region
        $region21: #{gat_forward.1} parent=11 // pred_check
          %p204 = pneg %p105
        $region22: #{gat_forward.1} parent=11 // pred_check_branch
          %206 = sbr.rel (%p204) target = $region24
        $region23: #{gat_forward.1} parent=11 // pred_region
          _
        $region24: #{gat_forward.1} parent=11 // pred_fallthru
          _
      $region12: #{gat_forward.1} parent=5 // pred_fallthru
        _
      %p207 = scmp.lt.s32.totalorder %s16, 2
      // Predicated region
      $region25: #{gat_forward.1} parent=5 // pred_check
        %p208 = pneg %p207
      $region26: #{gat_forward.1} parent=5 // pred_check_branch
        %210 = sbr.rel (%p208) target = $region28
      $region27: #{gat_forward.1} parent=5 // pred_region
        // Predicated region
        $region29: #{gat_forward.1} parent=27 // pred_check
          %p211 = pneg %p78
        $region30: #{gat_forward.1} parent=27 // pred_check_branch
          %213 = sbr.rel (%p211) target = $region32
        $region31: #{gat_forward.1} parent=27 // pred_region
          %s214 = sand.u32 %s68, 1
          %s215 = sand.u32 %s68, 1
          %s216 = smul.addr %s215, 16
          %s217 = scalar_lea.vmem [#allocation2], %s216
          %s218 = smul.addr %s16, 8
          %s219 = scalar_lea.vmem %s2, %s218
          // Predicated region
          $region33: #{gat_forward.1} parent=31 // pred_check
            _
          $region34: #{gat_forward.1} parent=31 // pred_check_branch
            %221 = sbr.rel (0) target = $region36
          $region35: #{gat_forward.1} parent=31 // pred_region
            // Predicated region
            $region37: #{gat_forward.1} parent=35 // pred_check
              _
            $region38: #{gat_forward.1} parent=35 // pred_check_branch
              %223 = sbr.rel (0) target = $region40
            $region39: #{gat_forward.1} parent=35 // pred_region
              // Predicated region
              $region52: #{gat_forward.1} parent=39 // pred_check
                _
              $region53: #{gat_forward.1} parent=39 // pred_check_branch
                %241 = sbr.rel (0) target = $region55
              $region54: #{gat_forward.1} parent=39 // pred_region
                loop: start=0, step=1, limit=1
                $region56: #{gat_forward.1} parent=54 // loop_pre_header
                  _
                $region57: #{gat_forward.1} parent=54 // loop_header
                  %s243 = sphi 0, %s247
                  %p244 = scmp.ge.s32.totalorder %s243, 1
                  %s248 = sphi %s219, %s219
                  %s249 = sphi %s217, %s217
                $region58: #{gat_forward.1} parent=54 // loop_header_branch
                  %246 = sbr.rel (%p244) target = $region62
                $region59: #{gat_forward.1} parent=54 // loop_body
                  %v250 = vld [vmem:[%s248] sm:$0xff]
                  %251 = vst [vmem:[%s249] sm:$0xff] %v250
                  %v252 = vld [vmem:[%s248 + $0x10] sm:$0xff]
                  %253 = vst [vmem:[%s249 + $0x8] sm:$0xff] %v252
                $region60: #{gat_forward.1} parent=54 // loop_footer
                  %s247 = sadd.s32 1, %s243
                $region61: #{gat_forward.1} parent=54 // loop_footer_branch
                  %242 = sbr.rel target = $region57
                $region62: #{gat_forward.1} parent=54 // loop_exit
                  _
              $region55: #{gat_forward.1} parent=39 // pred_fallthru
                _
              // Predicated region
              $region63: #{gat_forward.1} parent=39 // pred_check
                _
              $region64: #{gat_forward.1} parent=39 // pred_check_branch
                %255 = sbr.rel target = $region66
              $region65: #{gat_forward.1} parent=39 // pred_region
                _
              $region66: #{gat_forward.1} parent=39 // pred_fallthru
                _
            $region40: #{gat_forward.1} parent=35 // pred_fallthru
              _
            // Predicated region
            $region41: #{gat_forward.1} parent=35 // pred_check
              _
            $region42: #{gat_forward.1} parent=35 // pred_check_branch
              %225 = sbr.rel target = $region44
            $region43: #{gat_forward.1} parent=35 // pred_region
              %s227 = ssub.s32 256, 1
              loop: start=0, step=1, limit=1
              $region45: #{gat_forward.1} parent=43 // loop_pre_header
                _
              $region46: #{gat_forward.1} parent=43 // loop_header
                %s229 = sphi 0, %s233
                %p230 = scmp.ge.s32.totalorder %s229, 1
                %s234 = sphi %s219, %s219
                %s235 = sphi %s217, %s217
              $region47: #{gat_forward.1} parent=43 // loop_header_branch
                %232 = sbr.rel (%p230) target = $region51
              $region48: #{gat_forward.1} parent=43 // loop_body
                %v236 = vld [vmem:[%s234] sm:%s227]
                %237 = vst [vmem:[%s235] sm:%s227] %v236
                %v238 = vld [vmem:[%s234 + $0x10] sm:%s227]
                %239 = vst [vmem:[%s235 + $0x8] sm:%s227] %v238
              $region49: #{gat_forward.1} parent=43 // loop_footer
                %s233 = sadd.s32 1, %s229
              $region50: #{gat_forward.1} parent=43 // loop_footer_branch
                %228 = sbr.rel target = $region46
              $region51: #{gat_forward.1} parent=43 // loop_exit
                _
            $region44: #{gat_forward.1} parent=35 // pred_fallthru
              _
          $region36: #{gat_forward.1} parent=31 // pred_fallthru
            _
          %256 = vnop
        $region32: #{gat_forward.1} parent=27 // pred_fallthru
          _
        // Predicated region
        $region67: #{gat_forward.1} parent=27 // pred_check
          %p257 = pneg %p125
        $region68: #{gat_forward.1} parent=27 // pred_check_branch
          %259 = sbr.rel (%p257) target = $region70
        $region69: #{gat_forward.1} parent=27 // pred_region
          %p260 = scmp.lt.s32.totalorder %s16, 1
          %s261 = scalar_select %p260, %s16, 1
          %s262 = smul.addr %s261, 8
          %s263 = scalar_lea.vmem %s4, %s262
        $region70: #{gat_forward.1} parent=27 // pred_fallthru
          _
      $region28: #{gat_forward.1} parent=5 // pred_fallthru
        _
      %p264 = scmp.le.s32.totalorder 1, %s16
      %p265 = scmp.lt.s32.totalorder %s16, 3
      %p266 = pnand %p264, %p265
      %p267 = pneg %p266
      // Predicated region
      $region71: #{gat_forward.1} parent=5 // pred_check
        _
      $region72: #{gat_forward.1} parent=5 // pred_check_branch
        %269 = sbr.rel (%p266) target = $region74
      $region73: #{gat_forward.1} parent=5 // pred_region
        %s270 = ssub.s32 %s16, 1
        %s271 = sand.u32 %s71, 1
        %s272 = sand.u32 %s71, 1
        %s273 = smul.addr %s272, 16
        %s274 = scalar_lea.vmem [#allocation2], %s273
        // Predicated region
        $region75: #{gat_forward.1} parent=73 // pred_check
          %p275 = pneg %p84
        $region76: #{gat_forward.1} parent=73 // pred_check_branch
          %277 = sbr.rel (%p275) target = $region78
        $region77: #{gat_forward.1} parent=73 // pred_region
          _
        $region78: #{gat_forward.1} parent=73 // pred_fallthru
          _
        %p278 = pneg %p37
        %p279 = pneg %p34
        %p280 = pneg %p58
        %p281 = pneg %p55
        %s282 = sand.u32 %s71, 1
        %s283 = sand.u32 %s71, 1
        %s284 = smul.addr %s283, 16
        %s285 = scalar_lea.vmem [#allocation2], %s284
        %p286 = pneg %p84
        %p287 = pneg %p81
        %p288 = pneg %p105
        %p289 = pneg %p102
        %p290 = scmp.lt.s32.totalorder %s21, 1
        %s291 = scalar_select %p290, %s21, 1
        %s292 = smul.addr %s291, 8
        %s293 = scalar_lea.vmem %s4, %s292
        %p294 = pneg %p131
        %p295 = pneg %p128
        %p296 = pneg %p157
        %p297 = pneg %p154
        %s298 = sand.u32 %s144, 1
        %s299 = sand.u32 %s144, 1
        %s300 = smul.addr %s299, 8
        %s301 = scalar_lea.vmem [#allocation3], %s300
        %p302 = pneg %p183
        %p303 = pneg %p180
        %s304 = sand.u32 %s170, 1
        %s305 = scalar_lea.sflag [#allocation5], %s304
        %s306 = sand.u32 %s170, 1
        %s307 = smul.addr %s306, 8
        %s308 = scalar_lea.vmem [#allocation4], %s307
        %p309 = scmp.lt.s32.totalorder %s21, 1
        %s310 = scalar_select %p309, %s21, 1
        %s311 = smul.addr %s310, 8
        %s312 = scalar_lea.vmem %s4, %s311
        %v314 = vld [vmem:[%s274] sm:$0xff]
        %v315 = vld [vmem:[%s274 + $0x8] sm:$0xff]
        %v316 = vld [vmem:[%s1] sm:$0x1]
        %v317 = vld [vmem:[%s1 + $0x1] sm:$0x1]
        %319 = vset.pattern.permute.xlu0 0
        %320 = vperm.xlu0 %319, %v314
        %v321 = vpop.permute.xlu0 %320
        %324 = vset.pattern.permute.xlu0 0
        %325 = vperm.xlu0 %324, %v315
        %v326 = vpop.permute.xlu0 %325
        %v330 = vperm.slane %v316, 0
        %v331 = vperm.slane %v317, 0
        %v334 = vadd.f32 %v321, %v330
        %v335 = vadd.f32 %v326, %v331
        %v336 = vld [vmem:[%s312] sm:$0xff]
        %v337 = vadd.f32 %v334, %v336
        %v338 = vadd.f32 %v335, %v336
        %v339 = vmul.f32 %v337, 0.2
        %v340 = vmul.f32 %v338, 0.2
        %v341 = vmax.f32 %v337, %v339
        %v342 = vmax.f32 %v338, %v340
        %vm343 = vcmask 130048
        %v344 = vsel %vm343, %v341, -inf
        %345 = vmax.xlane.f32.xlu0 %v344
        %v346 = vpop.xlane.xlu0 %345
        %v347 = vsel %vm343, %v342, -inf
        %348 = vmax.xlane.f32.xlu0 %v347
        %v349 = vpop.xlane.xlu0 %348
        %v350 = vsub.f32 %v341, %v346
        %v351 = vsub.f32 %v342, %v349
        %v352 = vmul.f32 %v350, 1.442695
        %v353 = vpow.pop %v352
        %v354 = vmul.f32 %v351, 1.442695
        %v355 = vpow.pop %v354
        %v356 = vsel %vm343, %v353, 0.0
        %357 = vadd.xlane.f32.xlu0 %v356
        %v358 = vpop.xlane.xlu0 %357
        %v359 = vsel %vm343, %v355, 0.0
        %360 = vadd.xlane.f32.xlu0 %v359
        %v361 = vpop.xlane.xlu0 %360
        %v362 = vrcp.pop %v358
        %v363 = vrcp.pop %v361
        %v364 = vmul.f32 %v353, %v362
        %v365 = vmul.f32 %v355, %v363
        %v366 = vpack.c.bf16 %v364, %v364
        %v367 = vpack.c.bf16 %v365, %v365
        %vm368 = vcmask 125952
        %369 = vst.msk [vmem:[%s308] sm:$0xf] %vm368, %v366
        %370 = vst.msk [vmem:[%s308 + $0x4] sm:$0xf] %vm368, %v367
        %v371 = vld [vmem:[%s0] sm:$0xf]
        %v372 = vld [vmem:[%s0 + $0x4] sm:$0xf]
        %v373 = vld [vmem:[%s0 + $0x8] sm:$0xf]
        %v374 = vld [vmem:[%s0 + $0xc] sm:$0xf]
        %v375 = vld [vmem:[%s3] sm:$0x1]
        %v377 = vperm.slane %v375, 0
        %v381 = vunpack.c.l.b16 %v371
        %v382 = vunpack.c.l.b16 %v372
        %v383 = vpack.c.b16 %v382, %v381
        %v386 = vsel %vm343, %v366, 0
        %388 = vmatpush.bf16.msra.mxu0 0
        %389 = vmatpush.bf16.msra.mxu0 0
        %390 = vmatpush.bf16.msra.mxu0 0
        %391 = vmatpush.bf16.msra.mxu0 0
        %392 = vmatpush.bf16.msra.mxu0 0
        %393 = vmatpush.bf16.msra.mxu0 0
        %394 = vmatpush.bf16.msra.mxu0 0
        %395 = vmatpush.bf16.msra.mxu0 %v383
        %396 = vmatmul.bf16.gmra.mxu0 %v386
        %v397 = vpop.f32.mrf.mxu0
        %v398 = vadd.f32 %v377, %v397
        %v399 = vpop.f32.mrf.mxu0
        %400 = vdwg.mxu0
        %v403 = vunpack.c.l.b16 %v373
        %v404 = vunpack.c.l.b16 %v374
        %v405 = vpack.c.b16 %v404, %v403
        %v408 = vsel %vm343, %v367, 0
        %410 = vmatpush.bf16.msra.mxu0 0
        %411 = vmatpush.bf16.msra.mxu0 0
        %412 = vmatpush.bf16.msra.mxu0 0
        %413 = vmatpush.bf16.msra.mxu0 0
        %414 = vmatpush.bf16.msra.mxu0 0
        %415 = vmatpush.bf16.msra.mxu0 0
        %416 = vmatpush.bf16.msra.mxu0 0
        %417 = vmatpush.bf16.msra.mxu0 %v405
        %418 = vmatmul.bf16.gmra.mxu0 %v408
        %v419 = vpop.f32.mrf.mxu0
        %v420 = vadd.f32 %v377, %v419
        %v421 = vpop.f32.mrf.mxu0
        %422 = vdwg.mxu0
        %v423 = vpack.c.bf16 %v398, %v398
        %v424 = vpack.c.bf16 %v420, %v420
        %425 = vst [vmem:[%s301] sm:$0xf] %v423
        %426 = vst [vmem:[%s301 + $0x4] sm:$0xf] %v424
        %s427 = sand.u32 %s144, 1
        %s428 = sand.u32 %s144, 1
        %s429 = smul.addr %s428, 8
        %s430 = scalar_lea.vmem [#allocation3], %s429
        %s431 = sand.u32 %s170, 1
        %s432 = scalar_lea.sflag [#allocation5], %s431
        %s433 = sand.u32 %s170, 1
        %s434 = smul.addr %s433, 8
        %s435 = scalar_lea.vmem [#allocation4], %s434
        // Predicated region
        $region79: #{gat_forward.1} parent=73 // pred_check
          %p436 = pneg %p154
        $region80: #{gat_forward.1} parent=73 // pred_check_branch
          %438 = sbr.rel (%p436) target = $region82
        $region81: #{gat_forward.1} parent=73 // pred_region
          %s439 = smul.addr %s21, 4
          %s440 = scalar_lea.vmem %s5, %s439
          // Predicated region
          $region83: #{gat_forward.1} parent=81 // pred_check
            _
          $region84: #{gat_forward.1} parent=81 // pred_check_branch
            %442 = sbr.rel (0) target = $region86
          $region85: #{gat_forward.1} parent=81 // pred_region
            // Predicated region
            $region87: #{gat_forward.1} parent=85 // pred_check
              _
            $region88: #{gat_forward.1} parent=85 // pred_check_branch
              %444 = sbr.rel target = $region90
            $region89: #{gat_forward.1} parent=85 // pred_region
              // Predicated region
              $region102: #{gat_forward.1} parent=89 // pred_check
                _
              $region103: #{gat_forward.1} parent=89 // pred_check_branch
                %462 = sbr.rel (0) target = $region105
              $region104: #{gat_forward.1} parent=89 // pred_region
                loop: start=0, step=1, limit=1
                $region106: #{gat_forward.1} parent=104 // loop_pre_header
                  _
                $region107: #{gat_forward.1} parent=104 // loop_header
                  %s464 = sphi 0, %s468
                  %p465 = scmp.ge.s32.totalorder %s464, 1
                  %s469 = sphi %s430, %s430
                  %s470 = sphi %s440, %s440
                $region108: #{gat_forward.1} parent=104 // loop_header_branch
                  %467 = sbr.rel (%p465) target = $region112
                $region109: #{gat_forward.1} parent=104 // loop_body
                  _
                $region110: #{gat_forward.1} parent=104 // loop_footer
                  %s468 = sadd.s32 1, %s464
                $region111: #{gat_forward.1} parent=104 // loop_footer_branch
                  %463 = sbr.rel target = $region107
                $region112: #{gat_forward.1} parent=104 // loop_exit
                  _
                %s472 = ssub.s32 16, 1
                loop: start=0, step=1, limit=1
                $region113: #{gat_forward.1} parent=104 // loop_pre_header
                  _
                $region114: #{gat_forward.1} parent=104 // loop_header
                  %s474 = sphi 0, %s478
                  %p475 = scmp.ge.s32.totalorder %s474, 1
                  %s479 = sphi %s430, %s430
                  %s480 = sphi %s440, %s440
                $region115: #{gat_forward.1} parent=104 // loop_header_branch
                  %477 = sbr.rel (%p475) target = $region119
                $region116: #{gat_forward.1} parent=104 // loop_body
                  %v481 = vld [vmem:[%s479] sm:%s472]
                  %482 = vst [vmem:[%s480] sm:%s472] %v481
                  %v483 = vld [vmem:[%s479 + $0x4] sm:%s472]
                  %484 = vst [vmem:[%s480 + $0x8] sm:%s472] %v483
                $region117: #{gat_forward.1} parent=104 // loop_footer
                  %s478 = sadd.s32 1, %s474
                $region118: #{gat_forward.1} parent=104 // loop_footer_branch
                  %473 = sbr.rel target = $region114
                $region119: #{gat_forward.1} parent=104 // loop_exit
                  _
              $region105: #{gat_forward.1} parent=89 // pred_fallthru
                _
            $region90: #{gat_forward.1} parent=85 // pred_fallthru
              _
            // Predicated region
            $region91: #{gat_forward.1} parent=85 // pred_check
              _
            $region92: #{gat_forward.1} parent=85 // pred_check_branch
              %446 = sbr.rel (0) target = $region94
            $region93: #{gat_forward.1} parent=85 // pred_region
              %s448 = ssub.s32 16, 1
              loop: start=0, step=1, limit=1
              $region95: #{gat_forward.1} parent=93 // loop_pre_header
                _
              $region96: #{gat_forward.1} parent=93 // loop_header
                %s450 = sphi 0, %s454
                %p451 = scmp.ge.s32.totalorder %s450, 1
                %s455 = sphi %s430, %s430
                %s456 = sphi %s440, %s440
              $region97: #{gat_forward.1} parent=93 // loop_header_branch
                %453 = sbr.rel (%p451) target = $region101
              $region98: #{gat_forward.1} parent=93 // loop_body
                %v457 = vld [vmem:[%s455] sm:%s448]
                %458 = vst [vmem:[%s456] sm:%s448] %v457
                %v459 = vld [vmem:[%s455 + $0x4] sm:%s448]
                %460 = vst [vmem:[%s456 + $0x8] sm:%s448] %v459
              $region99: #{gat_forward.1} parent=93 // loop_footer
                %s454 = sadd.s32 1, %s450
              $region100: #{gat_forward.1} parent=93 // loop_footer_branch
                %449 = sbr.rel target = $region96
              $region101: #{gat_forward.1} parent=93 // loop_exit
                _
            $region94: #{gat_forward.1} parent=85 // pred_fallthru
              _
          $region86: #{gat_forward.1} parent=81 // pred_fallthru
            _
          %485 = vnop
        $region82: #{gat_forward.1} parent=73 // pred_fallthru
          _
        // Predicated region
        $region120: #{gat_forward.1} parent=73 // pred_check
          %p486 = pneg %p180
        $region121: #{gat_forward.1} parent=73 // pred_check_branch
          %488 = sbr.rel (%p486) target = $region123
        $region122: #{gat_forward.1} parent=73 // pred_region
          %490 = vsyncadd %s432, 0
          %s491 = smul.addr %s21, 4
          %s492 = scalar_lea.hbm %s6, %s491
          %s493 = sshll.u32 %s435, 4
          %s494 = int_to_ptr.vmem [resolvable:$true] %s493
          %s495 = sshll.u32 %s492, 4
          %s496 = int_to_ptr.hbm [resolvable:$true] %s495
          %501 = dma.vmem_to_hbm [thread:$0]  %s494, 128, %s496, %s432, 64, 128, 4
        $region123: #{gat_forward.1} parent=73 // pred_fallthru
          _
      $region74: #{gat_forward.1} parent=5 // pred_fallthru
        _
      %p502 = scmp.le.s32.totalorder 2, %s16
      // Predicated region
      $region124: #{gat_forward.1} parent=5 // pred_check
        %p503 = pneg %p502
      $region125: #{gat_forward.1} parent=5 // pred_check_branch
        %505 = sbr.rel (%p503) target = $region127
      $region126: #{gat_forward.1} parent=5 // pred_region
        %s506 = ssub.s32 %s16, 2
        // Predicated region
        $region128: #{gat_forward.1} parent=126 // pred_check
          %p507 = pneg %p160
        $region129: #{gat_forward.1} parent=126 // pred_check_branch
          %509 = sbr.rel (%p507) target = $region131
        $region130: #{gat_forward.1} parent=126 // pred_region
          %s510 = sand.u32 %s145, 1
          %s511 = sand.u32 %s145, 1
          %s512 = smul.addr %s511, 8
          %s513 = scalar_lea.vmem [#allocation3], %s512
        $region131: #{gat_forward.1} parent=126 // pred_fallthru
          _
        // Predicated region
        $region132: #{gat_forward.1} parent=126 // pred_check
          %p514 = pneg %p186
        $region133: #{gat_forward.1} parent=126 // pred_check_branch
          %516 = sbr.rel (%p514) target = $region135
        $region134: #{gat_forward.1} parent=126 // pred_region
          %s517 = sand.u32 %s171, 1
          %s518 = scalar_lea.sflag [#allocation5], %s517
          %s519 = sand.u32 %s171, 1
          %s520 = smul.addr %s519, 8
          %s521 = scalar_lea.vmem [#allocation4], %s520
          %523 = dma.done %s518, 128
        $region135: #{gat_forward.1} parent=126 // pred_fallthru
          _
      $region127: #{gat_forward.1} parent=5 // pred_fallthru
        _
    $region6: #{gat_forward.1} parent=1 // loop_footer
      %s20 = sadd.s32 1, %s16
    $region7: #{gat_forward.1} parent=1 // loop_footer_branch
      %15 = sbr.rel target = $region3
    $region8: #{gat_forward.1} parent=1 // loop_exit
      _
    %524 = vsyncpa [#allocation5], 1
    %s525 = scalar_lea.sflag [#allocation5], 1
    %526 = vsyncpa %s525, 1

</llo_original>
